<compile_context>
chip_gen: v5e
topology: v5e:2x2
jax: 0.10.0
libtpu: 0.0.40
codegen_flags: <defaults>
</compile_context>

<pallas_src>
import jax
import jax.numpy as jnp
from jax.experimental import pallas as pl
from jax.experimental.pallas import tpu as pltpu


def _make_fused_kernel(H, W, Cin, Cout):
    HW = H * W
    OFF = 2 * W                # start of the image region inside the staging buffers
    BUF = (H + 4) * W          # zero margin of 2*W on each side of the flattened image
    # tap t = dy*3 + dx ; flat shift in the pitch-W layout, plus which edge mask it needs
    taps = [((dy - 1) * W + (dx - 1), dx) for dy in range(3) for dx in range(3)]

    def kernel(x_ref, w1_ref, sb1_ref, w2_ref, sb2_ref, m_ref, o_ref,
               xbuf, ybuf, p1, p2):
        # ---- stage the input into a zero-margined flat buffer (in-kernel "same" padding) ----
        xbuf[...] = jnp.zeros_like(xbuf)
        ybuf[...] = jnp.zeros_like(ybuf)
        xbuf[:, OFF:OFF + HW] = x_ref[0]          # one dense (C, H*W) copy, no host pad

        def build_patches(src_buf, dst_patch, nch):
            # dst_patch[t*nch:(t+1)*nch, j] = src_buf[:, OFF + j + shift_t]  (edge-masked)
            for t, (s, dx) in enumerate(taps):
                win = src_buf[:, OFF + s:OFF + s + HW]
                if dx == 0:        # left neighbour tap: zero columns where w == 0
                    win = win * m_ref[0:1, :]
                elif dx == 2:      # right neighbour tap: zero columns where w == W-1
                    win = win * m_ref[1:2, :]
                dst_patch[t * nch:(t + 1) * nch, :] = win

        # ---- layer 1: 3x3 conv as one im2col matmul + folded BN affine + ReLU ----
        build_patches(xbuf, p1, Cin)
        y1 = jnp.dot(w1_ref[...], p1[...].astype(jnp.bfloat16),
                     preferred_element_type=jnp.float32)
        y1 = jnp.maximum(y1 * sb1_ref[0] + sb1_ref[1], 0.0)
        # TODO(synk): Dropout2d is identity in eval mode; training-mode channel dropout not implemented.
        ybuf[:, OFF:OFF + HW] = y1                # intermediate stays in VMEM (no HBM round trip)

        # ---- layer 2 ----
        build_patches(ybuf, p2, Cout)
        y2 = jnp.dot(w2_ref[...], p2[...].astype(jnp.bfloat16),
                     preferred_element_type=jnp.float32)
        y2 = jnp.maximum(y2 * sb2_ref[0] + sb2_ref[1], 0.0)
        o_ref[0] = y2.astype(o_ref.dtype)         # lane-dense (Cout, H*W) store

    return kernel, BUF


def conv_block_bn_forward(x_nchw, params):
    """ConvBlockBn forward (eval mode). Input/output NCHW like PyTorch."""
    N, Cin, H, W = x_nchw.shape
    Cout = params["sb1"].shape[1]
    HW = H * W

    kernel, BUF = _make_fused_kernel(H, W, Cin, Cout)

    # Lane-dense flat layout (N, C, H*W): contiguous reshape of NCHW -> free, no transpose.
    x_flat = x_nchw.reshape(N, Cin, HW)

    # Column masks fixing horizontal wrap of the flattened (pitch = W) layout.
    col = jnp.arange(HW, dtype=jnp.int32) % W
    masks = jnp.stack([(col != 0), (col != W - 1)]).astype(jnp.float32)   # (2, H*W)

    out_flat = pl.pallas_call(
        kernel,
        out_shape=jax.ShapeDtypeStruct((N, Cout, HW), x_nchw.dtype),
        grid_spec=pltpu.PrefetchScalarGridSpec(
            num_scalar_prefetch=0,
            grid=(N,),
            in_specs=[
                pl.BlockSpec((1, Cin, HW), lambda n: (n, 0, 0)),       # x (flattened NCHW)
                pl.BlockSpec((Cout, 9 * Cin), lambda n: (0, 0)),       # W1 matrix (bf16)
                pl.BlockSpec((2, Cout, 1), lambda n: (0, 0, 0)),       # layer-1 scale/bias
                pl.BlockSpec((Cout, 9 * Cout), lambda n: (0, 0)),      # W2 matrix (bf16)
                pl.BlockSpec((2, Cout, 1), lambda n: (0, 0, 0)),       # layer-2 scale/bias
                pl.BlockSpec((2, HW), lambda n: (0, 0)),               # edge masks
            ],
            out_specs=pl.BlockSpec((1, Cout, HW), lambda n: (n, 0, 0)),
            scratch_shapes=[
                pltpu.VMEM((Cin, BUF), jnp.float32),      # zero-padded input staging
                pltpu.VMEM((Cout, BUF), jnp.float32),     # zero-padded layer-1 activation
                pltpu.VMEM((9 * Cin, HW), jnp.float32),   # layer-1 im2col patch matrix
                pltpu.VMEM((9 * Cout, HW), jnp.float32),  # layer-2 im2col patch matrix
            ],
        ),
        compiler_params=pltpu.CompilerParams(
            dimension_semantics=("parallel",),            # batch across TCs (v7x megacore)
            vmem_limit_bytes=8 * 1024 * 1024,             # explicit; far above ~0.2 MiB used
        ),
    )(x_flat, params["w1m"], params["sb1"], params["w2m"], params["sb2"], masks)

    # TODO(synk): for large images (v7x 64 MiB VMEM) add an H-tile grid axis with a 1-row halo.
    return out_flat.reshape(N, Cout, H, W)     # contiguous reshape, free


def make_params(key, in_chans, out_chans, eps=1e-5):
    """Deterministic synthetic parameters (conv weights+bias, BN affine, fresh running stats)."""
    ks = jax.random.split(key, 8)

    def fold(b_conv, gamma, beta, running_mean, running_var):
        scale = gamma / jnp.sqrt(running_var + eps)
        bias = (b_conv - running_mean) * scale + beta
        return scale, bias

    def to_mat(w_oihw):
        # (Cout, Cin, 3, 3) -> (Cout, 9*Cin), column index = (dy*3 + dx)*Cin + ci
        co, ci = w_oihw.shape[0], w_oihw.shape[1]
        return jnp.transpose(w_oihw, (0, 2, 3, 1)).reshape(co, 9 * ci).astype(jnp.bfloat16)

    w1 = 0.1 * jax.random.normal(ks[0], (out_chans, in_chans, 3, 3), jnp.float32)   # OIHW
    b1 = 0.1 * jax.random.normal(ks[1], (out_chans,), jnp.float32)
    g1 = 1.0 + 0.1 * jax.random.normal(ks[2], (out_chans,), jnp.float32)
    be1 = 0.1 * jax.random.normal(ks[3], (out_chans,), jnp.float32)
    scale1, bias1 = fold(b1, g1, be1, jnp.zeros((out_chans,)), jnp.ones((out_chans,)))

    w2 = 0.1 * jax.random.normal(ks[4], (out_chans, out_chans, 3, 3), jnp.float32)  # OIHW
    b2 = 0.1 * jax.random.normal(ks[5], (out_chans,), jnp.float32)
    g2 = 1.0 + 0.1 * jax.random.normal(ks[6], (out_chans,), jnp.float32)
    be2 = 0.1 * jax.random.normal(ks[7], (out_chans,), jnp.float32)
    scale2, bias2 = fold(b2, g2, be2, jnp.zeros((out_chans,)), jnp.ones((out_chans,)))

    return dict(
        # reference-layout params
        w1=w1, scale1=scale1, bias1=bias1,
        w2=w2, scale2=scale2, bias2=bias2,
        # kernel-layout params
        w1m=to_mat(w1), sb1=jnp.stack([scale1, bias1]).reshape(2, out_chans, 1),
        w2m=to_mat(w2), sb2=jnp.stack([scale2, bias2]).reshape(2, out_chans, 1),
    )


def _reference_forward(x_nchw, params):
    """Pure-JAX f32 reference (same eval-mode semantics) for the correctness check."""
    def block(x, w, scale, bias):
        y = jax.lax.conv_general_dilated(
            x, w, window_strides=(1, 1), padding="SAME",
            dimension_numbers=("NCHW", "OIHW", "NCHW"),
            precision=jax.lax.Precision.HIGHEST)
        return jnp.maximum(y * scale[None, :, None, None] + bias[None, :, None, None], 0.0)

    x = block(x_nchw, params["w1"], params["scale1"], params["bias1"])
    x = block(x, params["w2"], params["scale2"], params["bias2"])
    return x


if __name__ == "__main__":
    key = jax.random.PRNGKey(0)
    k_x, k_p = jax.random.split(key)

    batch, in_chans, out_chans, H, W = 2, 4, 8, 16, 16
    x = jax.random.normal(k_x, (batch, in_chans, H, W), jnp.float32)   # NCHW like PyTorch
    params = make_params(k_p, in_chans, out_chans)

    out = jax.jit(conv_block_bn_forward)(x, params)
    out = jax.block_until_ready(out)

    ref = _reference_forward(x, params)
    assert out.shape == (batch, out_chans, H, W), out.shape
    # f32 HIGHEST-precision reference; 5e-2 bound covers the bf16 MXU operands.
    err = float(jnp.max(jnp.abs(out - ref)))
    assert jnp.allclose(out, ref, rtol=5e-2, atol=5e-2), err

    print("KERNEL_OK")
</pallas_src>

<mosaic_0001>
module attributes {stable_mosaic.version = 11 : i64} {
  func.func @kernel(%arg0: i32, %arg1: memref<1x4x256xf32, #tpu.memory_space<vmem>>, %arg2: memref<8x36xbf16, #tpu.memory_space<vmem>>, %arg3: memref<2x8x1xf32, #tpu.memory_space<vmem>>, %arg4: memref<8x72xbf16, #tpu.memory_space<vmem>>, %arg5: memref<2x8x1xf32, #tpu.memory_space<vmem>>, %arg6: memref<2x256xf32, #tpu.memory_space<vmem>>, %arg7: memref<1x8x256xf32, #tpu.memory_space<vmem>>, %arg8: memref<4x320xf32, #tpu.memory_space<vmem>>, %arg9: memref<8x320xf32, #tpu.memory_space<vmem>>, %arg10: memref<36x256xf32, #tpu.memory_space<vmem>>, %arg11: memref<72x256xf32, #tpu.memory_space<vmem>>) attributes {dimension_semantics = [#tpu.dimension_semantics<parallel>], iteration_bounds = array<i64: 2>, scalar_prefetch = 0 : i64, scratch_operands = 4 : i64, tpu.core_type = #tpu.core_type<tc>, window_params = [{transform_indices = @transform_0, window_bounds = array<i64: 1, 4, 256>}, {pipeline_mode = #tpu.pipeline_mode<synchronous>, transform_indices = @transform_1, window_bounds = array<i64: 8, 36>}, {pipeline_mode = #tpu.pipeline_mode<synchronous>, transform_indices = @transform_2, window_bounds = array<i64: 2, 8, 1>}, {pipeline_mode = #tpu.pipeline_mode<synchronous>, transform_indices = @transform_3, window_bounds = array<i64: 8, 72>}, {pipeline_mode = #tpu.pipeline_mode<synchronous>, transform_indices = @transform_4, window_bounds = array<i64: 2, 8, 1>}, {pipeline_mode = #tpu.pipeline_mode<synchronous>, transform_indices = @transform_5, window_bounds = array<i64: 2, 256>}, {transform_indices = @transform_6, window_bounds = array<i64: 1, 8, 256>}]} {
    %cst = arith.constant 0.000000e+00 : f32
    %0 = vector.broadcast %cst : f32 to vector<4x320xf32>
    %c0 = arith.constant 0 : index
    %c0_0 = arith.constant 0 : index
    %1 = vector.load %arg8[%c0, %c0_0] : memref<4x320xf32, #tpu.memory_space<vmem>>, vector<4x320xf32>
    tpu.vector_store %arg8[%c0, %c0_0], %0 {strides = array<i32>} : memref<4x320xf32, #tpu.memory_space<vmem>>, vector<4x320xf32>,
    %cst_1 = arith.constant 0.000000e+00 : f32
    %2 = vector.broadcast %cst_1 : f32 to vector<8x320xf32>
    %c0_2 = arith.constant 0 : index
    %c0_3 = arith.constant 0 : index
    %3 = vector.load %arg9[%c0_2, %c0_3] : memref<8x320xf32, #tpu.memory_space<vmem>>, vector<8x320xf32>
    tpu.vector_store %arg9[%c0_2, %c0_3], %2 {strides = array<i32>} : memref<8x320xf32, #tpu.memory_space<vmem>>, vector<8x320xf32>,
    %c0_4 = arith.constant 0 : index
    %c0_5 = arith.constant 0 : index
    %c0_6 = arith.constant 0 : index
    %4 = vector.load %arg1[%c0_4, %c0_5, %c0_6] : memref<1x4x256xf32, #tpu.memory_space<vmem>>, vector<1x4x256xf32>
    %5 = vector.shape_cast %4 : vector<1x4x256xf32> to vector<4x256xf32>
    %c0_7 = arith.constant 0 : index
    %c32 = arith.constant 32 : index
    %6 = vector.load %arg8[%c0_7, %c32] : memref<4x320xf32, #tpu.memory_space<vmem>>, vector<4x256xf32>
    tpu.vector_store %arg8[%c0_7, %c32], %5 {strides = array<i32>} : memref<4x320xf32, #tpu.memory_space<vmem>>, vector<4x256xf32>,
    %c0_8 = arith.constant 0 : index
    %c15 = arith.constant 15 : index
    %7 = vector.load %arg8[%c0_8, %c15] : memref<4x320xf32, #tpu.memory_space<vmem>>, vector<4x256xf32>
    %c0_9 = arith.constant 0 : index
    %c0_10 = arith.constant 0 : index
    %8 = vector.load %arg6[%c0_9, %c0_10] : memref<2x256xf32, #tpu.memory_space<vmem>>, vector<1x256xf32>
    %9 = vector.broadcast %8 : vector<1x256xf32> to vector<4x256xf32>
    %10 = arith.mulf %7, %9 : vector<4x256xf32>
    %c0_11 = arith.constant 0 : index
    %c0_12 = arith.constant 0 : index
    %11 = vector.load %arg10[%c0_11, %c0_12] : memref<36x256xf32, #tpu.memory_space<vmem>>, vector<4x256xf32>
    tpu.vector_store %arg10[%c0_11, %c0_12], %10 {strides = array<i32>} : memref<36x256xf32, #tpu.memory_space<vmem>>, vector<4x256xf32>,
    %c0_13 = arith.constant 0 : index
    %c16 = arith.constant 16 : index
    %12 = vector.load %arg8[%c0_13, %c16] : memref<4x320xf32, #tpu.memory_space<vmem>>, vector<4x256xf32>
    %c4 = arith.constant 4 : index
    %c0_14 = arith.constant 0 : index
    %13 = vector.load %arg10[%c4, %c0_14] : memref<36x256xf32, #tpu.memory_space<vmem>>, vector<4x256xf32>
    tpu.vector_store %arg10[%c4, %c0_14], %12 {strides = array<i32>} : memref<36x256xf32, #tpu.memory_space<vmem>>, vector<4x256xf32>,
    %c0_15 = arith.constant 0 : index
    %c17 = arith.constant 17 : index
    %14 = vector.load %arg8[%c0_15, %c17] : memref<4x320xf32, #tpu.memory_space<vmem>>, vector<4x256xf32>
    %c1 = arith.constant 1 : index
    %c0_16 = arith.constant 0 : index
    %15 = vector.load %arg6[%c1, %c0_16] : memref<2x256xf32, #tpu.memory_space<vmem>>, vector<1x256xf32>
    %16 = vector.broadcast %15 : vector<1x256xf32> to vector<4x256xf32>
    %17 = arith.mulf %14, %16 : vector<4x256xf32>
    %c8 = arith.constant 8 : index
    %c0_17 = arith.constant 0 : index
    %18 = vector.load %arg10[%c8, %c0_17] : memref<36x256xf32, #tpu.memory_space<vmem>>, vector<4x256xf32>
    tpu.vector_store %arg10[%c8, %c0_17], %17 {strides = array<i32>} : memref<36x256xf32, #tpu.memory_space<vmem>>, vector<4x256xf32>,
    %c0_18 = arith.constant 0 : index
    %c31 = arith.constant 31 : index
    %19 = vector.load %arg8[%c0_18, %c31] : memref<4x320xf32, #tpu.memory_space<vmem>>, vector<4x256xf32>
    %c0_19 = arith.constant 0 : index
    %c0_20 = arith.constant 0 : index
    %20 = vector.load %arg6[%c0_19, %c0_20] : memref<2x256xf32, #tpu.memory_space<vmem>>, vector<1x256xf32>
    %21 = vector.broadcast %20 : vector<1x256xf32> to vector<4x256xf32>
    %22 = arith.mulf %19, %21 : vector<4x256xf32>
    %c12 = arith.constant 12 : index
    %c0_21 = arith.constant 0 : index
    %23 = vector.load %arg10[%c12, %c0_21] : memref<36x256xf32, #tpu.memory_space<vmem>>, vector<4x256xf32>
    tpu.vector_store %arg10[%c12, %c0_21], %22 {strides = array<i32>} : memref<36x256xf32, #tpu.memory_space<vmem>>, vector<4x256xf32>,
    %c0_22 = arith.constant 0 : index
    %c32_23 = arith.constant 32 : index
    %24 = vector.load %arg8[%c0_22, %c32_23] : memref<4x320xf32, #tpu.memory_space<vmem>>, vector<4x256xf32>
    %c16_24 = arith.constant 16 : index
    %c0_25 = arith.constant 0 : index
    %25 = vector.load %arg10[%c16_24, %c0_25] : memref<36x256xf32, #tpu.memory_space<vmem>>, vector<4x256xf32>
    tpu.vector_store %arg10[%c16_24, %c0_25], %24 {strides = array<i32>} : memref<36x256xf32, #tpu.memory_space<vmem>>, vector<4x256xf32>,
    %c0_26 = arith.constant 0 : index
    %c33 = arith.constant 33 : index
    %26 = vector.load %arg8[%c0_26, %c33] : memref<4x320xf32, #tpu.memory_space<vmem>>, vector<4x256xf32>
    %c1_27 = arith.constant 1 : index
    %c0_28 = arith.constant 0 : index
    %27 = vector.load %arg6[%c1_27, %c0_28] : memref<2x256xf32, #tpu.memory_space<vmem>>, vector<1x256xf32>
    %28 = vector.broadcast %27 : vector<1x256xf32> to vector<4x256xf32>
    %29 = arith.mulf %26, %28 : vector<4x256xf32>
    %c20 = arith.constant 20 : index
    %c0_29 = arith.constant 0 : index
    %30 = vector.load %arg10[%c20, %c0_29] : memref<36x256xf32, #tpu.memory_space<vmem>>, vector<4x256xf32>
    tpu.vector_store %arg10[%c20, %c0_29], %29 {strides = array<i32>} : memref<36x256xf32, #tpu.memory_space<vmem>>, vector<4x256xf32>,
    %c0_30 = arith.constant 0 : index
    %c47 = arith.constant 47 : index
    %31 = vector.load %arg8[%c0_30, %c47] : memref<4x320xf32, #tpu.memory_space<vmem>>, vector<4x256xf32>
    %c0_31 = arith.constant 0 : index
    %c0_32 = arith.constant 0 : index
    %32 = vector.load %arg6[%c0_31, %c0_32] : memref<2x256xf32, #tpu.memory_space<vmem>>, vector<1x256xf32>
    %33 = vector.broadcast %32 : vector<1x256xf32> to vector<4x256xf32>
    %34 = arith.mulf %31, %33 : vector<4x256xf32>
    %c24 = arith.constant 24 : index
    %c0_33 = arith.constant 0 : index
    %35 = vector.load %arg10[%c24, %c0_33] : memref<36x256xf32, #tpu.memory_space<vmem>>, vector<4x256xf32>
    tpu.vector_store %arg10[%c24, %c0_33], %34 {strides = array<i32>} : memref<36x256xf32, #tpu.memory_space<vmem>>, vector<4x256xf32>,
    %c0_34 = arith.constant 0 : index
    %c48 = arith.constant 48 : index
    %36 = vector.load %arg8[%c0_34, %c48] : memref<4x320xf32, #tpu.memory_space<vmem>>, vector<4x256xf32>
    %c28 = arith.constant 28 : index
    %c0_35 = arith.constant 0 : index
    %37 = vector.load %arg10[%c28, %c0_35] : memref<36x256xf32, #tpu.memory_space<vmem>>, vector<4x256xf32>
    tpu.vector_store %arg10[%c28, %c0_35], %36 {strides = array<i32>} : memref<36x256xf32, #tpu.memory_space<vmem>>, vector<4x256xf32>,
    %c0_36 = arith.constant 0 : index
    %c49 = arith.constant 49 : index
    %38 = vector.load %arg8[%c0_36, %c49] : memref<4x320xf32, #tpu.memory_space<vmem>>, vector<4x256xf32>
    %c1_37 = arith.constant 1 : index
    %c0_38 = arith.constant 0 : index
    %39 = vector.load %arg6[%c1_37, %c0_38] : memref<2x256xf32, #tpu.memory_space<vmem>>, vector<1x256xf32>
    %40 = vector.broadcast %39 : vector<1x256xf32> to vector<4x256xf32>
    %41 = arith.mulf %38, %40 : vector<4x256xf32>
    %c32_39 = arith.constant 32 : index
    %c0_40 = arith.constant 0 : index
    %42 = vector.load %arg10[%c32_39, %c0_40] : memref<36x256xf32, #tpu.memory_space<vmem>>, vector<4x256xf32>
    tpu.vector_store %arg10[%c32_39, %c0_40], %41 {strides = array<i32>} : memref<36x256xf32, #tpu.memory_space<vmem>>, vector<4x256xf32>,
    %c0_41 = arith.constant 0 : index
    %c0_42 = arith.constant 0 : index
    %43 = vector.load %arg2[%c0_41, %c0_42] : memref<8x36xbf16, #tpu.memory_space<vmem>>, vector<8x36xbf16>
    %c0_43 = arith.constant 0 : index
    %c0_44 = arith.constant 0 : index
    %44 = vector.load %arg10[%c0_43, %c0_44] : memref<36x256xf32, #tpu.memory_space<vmem>>, vector<36x256xf32>
    %45 = arith.truncf %44 : vector<36x256xf32> to vector<36x256xbf16>
    %cst_45 = arith.constant dense<0.000000e+00> : vector<8x256xf32>
    %46 = tpu.matmul %43, %45, %cst_45 {dimension_numbers = #tpu.dot_dimension_numbers<[1], [0], [0], [1], [0, 0, 1, 1], [], []>} : vector<8x36xbf16>, vector<36x256xbf16>, vector<8x256xf32> -> vector<8x256xf32>
    %c0_46 = arith.constant 0 : index
    %c0_47 = arith.constant 0 : index
    %c0_48 = arith.constant 0 : index
    %47 = vector.load %arg3[%c0_46, %c0_47, %c0_48] : memref<2x8x1xf32, #tpu.memory_space<vmem>>, vector<1x8x1xf32>
    %48 = vector.shape_cast %47 : vector<1x8x1xf32> to vector<8x1xf32>
    %49 = vector.broadcast %48 : vector<8x1xf32> to vector<8x256xf32>
    %50 = arith.mulf %46, %49 : vector<8x256xf32>
    %c1_49 = arith.constant 1 : index
    %c0_50 = arith.constant 0 : index
    %c0_51 = arith.constant 0 : index
    %51 = vector.load %arg3[%c1_49, %c0_50, %c0_51] : memref<2x8x1xf32, #tpu.memory_space<vmem>>, vector<1x8x1xf32>
    %52 = vector.shape_cast %51 : vector<1x8x1xf32> to vector<8x1xf32>
    %53 = vector.broadcast %52 : vector<8x1xf32> to vector<8x256xf32>
    %54 = arith.addf %50, %53 : vector<8x256xf32>
    %cst_52 = arith.constant 0.000000e+00 : f32
    %55 = vector.broadcast %cst_52 : f32 to vector<8x256xf32>
    %56 = arith.maximumf %54, %55 : vector<8x256xf32>
    %c0_53 = arith.constant 0 : index
    %c32_54 = arith.constant 32 : index
    %57 = vector.load %arg9[%c0_53, %c32_54] : memref<8x320xf32, #tpu.memory_space<vmem>>, vector<8x256xf32>
    tpu.vector_store %arg9[%c0_53, %c32_54], %56 {strides = array<i32>} : memref<8x320xf32, #tpu.memory_space<vmem>>, vector<8x256xf32>,
    %c0_55 = arith.constant 0 : index
    %c15_56 = arith.constant 15 : index
    %58 = vector.load %arg9[%c0_55, %c15_56] : memref<8x320xf32, #tpu.memory_space<vmem>>, vector<8x256xf32>
    %c0_57 = arith.constant 0 : index
    %c0_58 = arith.constant 0 : index
    %59 = vector.load %arg6[%c0_57, %c0_58] : memref<2x256xf32, #tpu.memory_space<vmem>>, vector<1x256xf32>
    %60 = vector.broadcast %59 : vector<1x256xf32> to vector<8x256xf32>
    %61 = arith.mulf %58, %60 : vector<8x256xf32>
    %c0_59 = arith.constant 0 : index
    %c0_60 = arith.constant 0 : index
    %62 = vector.load %arg11[%c0_59, %c0_60] : memref<72x256xf32, #tpu.memory_space<vmem>>, vector<8x256xf32>
    tpu.vector_store %arg11[%c0_59, %c0_60], %61 {strides = array<i32>} : memref<72x256xf32, #tpu.memory_space<vmem>>, vector<8x256xf32>,
    %c0_61 = arith.constant 0 : index
    %c16_62 = arith.constant 16 : index
    %63 = vector.load %arg9[%c0_61, %c16_62] : memref<8x320xf32, #tpu.memory_space<vmem>>, vector<8x256xf32>
    %c8_63 = arith.constant 8 : index
    %c0_64 = arith.constant 0 : index
    %64 = vector.load %arg11[%c8_63, %c0_64] : memref<72x256xf32, #tpu.memory_space<vmem>>, vector<8x256xf32>
    tpu.vector_store %arg11[%c8_63, %c0_64], %63 {strides = array<i32>} : memref<72x256xf32, #tpu.memory_space<vmem>>, vector<8x256xf32>,
    %c0_65 = arith.constant 0 : index
    %c17_66 = arith.constant 17 : index
    %65 = vector.load %arg9[%c0_65, %c17_66] : memref<8x320xf32, #tpu.memory_space<vmem>>, vector<8x256xf32>
    %c1_67 = arith.constant 1 : index
    %c0_68 = arith.constant 0 : index
    %66 = vector.load %arg6[%c1_67, %c0_68] : memref<2x256xf32, #tpu.memory_space<vmem>>, vector<1x256xf32>
    %67 = vector.broadcast %66 : vector<1x256xf32> to vector<8x256xf32>
    %68 = arith.mulf %65, %67 : vector<8x256xf32>
    %c16_69 = arith.constant 16 : index
    %c0_70 = arith.constant 0 : index
    %69 = vector.load %arg11[%c16_69, %c0_70] : memref<72x256xf32, #tpu.memory_space<vmem>>, vector<8x256xf32>
    tpu.vector_store %arg11[%c16_69, %c0_70], %68 {strides = array<i32>} : memref<72x256xf32, #tpu.memory_space<vmem>>, vector<8x256xf32>,
    %c0_71 = arith.constant 0 : index
    %c31_72 = arith.constant 31 : index
    %70 = vector.load %arg9[%c0_71, %c31_72] : memref<8x320xf32, #tpu.memory_space<vmem>>, vector<8x256xf32>
    %c0_73 = arith.constant 0 : index
    %c0_74 = arith.constant 0 : index
    %71 = vector.load %arg6[%c0_73, %c0_74] : memref<2x256xf32, #tpu.memory_space<vmem>>, vector<1x256xf32>
    %72 = vector.broadcast %71 : vector<1x256xf32> to vector<8x256xf32>
    %73 = arith.mulf %70, %72 : vector<8x256xf32>
    %c24_75 = arith.constant 24 : index
    %c0_76 = arith.constant 0 : index
    %74 = vector.load %arg11[%c24_75, %c0_76] : memref<72x256xf32, #tpu.memory_space<vmem>>, vector<8x256xf32>
    tpu.vector_store %arg11[%c24_75, %c0_76], %73 {strides = array<i32>} : memref<72x256xf32, #tpu.memory_space<vmem>>, vector<8x256xf32>,
    %c0_77 = arith.constant 0 : index
    %c32_78 = arith.constant 32 : index
    %75 = vector.load %arg9[%c0_77, %c32_78] : memref<8x320xf32, #tpu.memory_space<vmem>>, vector<8x256xf32>
    %c32_79 = arith.constant 32 : index
    %c0_80 = arith.constant 0 : index
    %76 = vector.load %arg11[%c32_79, %c0_80] : memref<72x256xf32, #tpu.memory_space<vmem>>, vector<8x256xf32>
    tpu.vector_store %arg11[%c32_79, %c0_80], %75 {strides = array<i32>} : memref<72x256xf32, #tpu.memory_space<vmem>>, vector<8x256xf32>,
    %c0_81 = arith.constant 0 : index
    %c33_82 = arith.constant 33 : index
    %77 = vector.load %arg9[%c0_81, %c33_82] : memref<8x320xf32, #tpu.memory_space<vmem>>, vector<8x256xf32>
    %c1_83 = arith.constant 1 : index
    %c0_84 = arith.constant 0 : index
    %78 = vector.load %arg6[%c1_83, %c0_84] : memref<2x256xf32, #tpu.memory_space<vmem>>, vector<1x256xf32>
    %79 = vector.broadcast %78 : vector<1x256xf32> to vector<8x256xf32>
    %80 = arith.mulf %77, %79 : vector<8x256xf32>
    %c40 = arith.constant 40 : index
    %c0_85 = arith.constant 0 : index
    %81 = vector.load %arg11[%c40, %c0_85] : memref<72x256xf32, #tpu.memory_space<vmem>>, vector<8x256xf32>
    tpu.vector_store %arg11[%c40, %c0_85], %80 {strides = array<i32>} : memref<72x256xf32, #tpu.memory_space<vmem>>, vector<8x256xf32>,
    %c0_86 = arith.constant 0 : index
    %c47_87 = arith.constant 47 : index
    %82 = vector.load %arg9[%c0_86, %c47_87] : memref<8x320xf32, #tpu.memory_space<vmem>>, vector<8x256xf32>
    %c0_88 = arith.constant 0 : index
    %c0_89 = arith.constant 0 : index
    %83 = vector.load %arg6[%c0_88, %c0_89] : memref<2x256xf32, #tpu.memory_space<vmem>>, vector<1x256xf32>
    %84 = vector.broadcast %83 : vector<1x256xf32> to vector<8x256xf32>
    %85 = arith.mulf %82, %84 : vector<8x256xf32>
    %c48_90 = arith.constant 48 : index
    %c0_91 = arith.constant 0 : index
    %86 = vector.load %arg11[%c48_90, %c0_91] : memref<72x256xf32, #tpu.memory_space<vmem>>, vector<8x256xf32>
    tpu.vector_store %arg11[%c48_90, %c0_91], %85 {strides = array<i32>} : memref<72x256xf32, #tpu.memory_space<vmem>>, vector<8x256xf32>,
    %c0_92 = arith.constant 0 : index
    %c48_93 = arith.constant 48 : index
    %87 = vector.load %arg9[%c0_92, %c48_93] : memref<8x320xf32, #tpu.memory_space<vmem>>, vector<8x256xf32>
    %c56 = arith.constant 56 : index
    %c0_94 = arith.constant 0 : index
    %88 = vector.load %arg11[%c56, %c0_94] : memref<72x256xf32, #tpu.memory_space<vmem>>, vector<8x256xf32>
    tpu.vector_store %arg11[%c56, %c0_94], %87 {strides = array<i32>} : memref<72x256xf32, #tpu.memory_space<vmem>>, vector<8x256xf32>,
    %c0_95 = arith.constant 0 : index
    %c49_96 = arith.constant 49 : index
    %89 = vector.load %arg9[%c0_95, %c49_96] : memref<8x320xf32, #tpu.memory_space<vmem>>, vector<8x256xf32>
    %c1_97 = arith.constant 1 : index
    %c0_98 = arith.constant 0 : index
    %90 = vector.load %arg6[%c1_97, %c0_98] : memref<2x256xf32, #tpu.memory_space<vmem>>, vector<1x256xf32>
    %91 = vector.broadcast %90 : vector<1x256xf32> to vector<8x256xf32>
    %92 = arith.mulf %89, %91 : vector<8x256xf32>
    %c64 = arith.constant 64 : index
    %c0_99 = arith.constant 0 : index
    %93 = vector.load %arg11[%c64, %c0_99] : memref<72x256xf32, #tpu.memory_space<vmem>>, vector<8x256xf32>
    tpu.vector_store %arg11[%c64, %c0_99], %92 {strides = array<i32>} : memref<72x256xf32, #tpu.memory_space<vmem>>, vector<8x256xf32>,
    %c0_100 = arith.constant 0 : index
    %c0_101 = arith.constant 0 : index
    %94 = vector.load %arg4[%c0_100, %c0_101] : memref<8x72xbf16, #tpu.memory_space<vmem>>, vector<8x72xbf16>
    %c0_102 = arith.constant 0 : index
    %c0_103 = arith.constant 0 : index
    %95 = vector.load %arg11[%c0_102, %c0_103] : memref<72x256xf32, #tpu.memory_space<vmem>>, vector<72x256xf32>
    %96 = arith.truncf %95 : vector<72x256xf32> to vector<72x256xbf16>
    %cst_104 = arith.constant dense<0.000000e+00> : vector<8x256xf32>
    %97 = tpu.matmul %94, %96, %cst_104 {dimension_numbers = #tpu.dot_dimension_numbers<[1], [0], [0], [1], [0, 0, 1, 1], [], []>} : vector<8x72xbf16>, vector<72x256xbf16>, vector<8x256xf32> -> vector<8x256xf32>
    %c0_105 = arith.constant 0 : index
    %c0_106 = arith.constant 0 : index
    %c0_107 = arith.constant 0 : index
    %98 = vector.load %arg5[%c0_105, %c0_106, %c0_107] : memref<2x8x1xf32, #tpu.memory_space<vmem>>, vector<1x8x1xf32>
    %99 = vector.shape_cast %98 : vector<1x8x1xf32> to vector<8x1xf32>
    %100 = vector.broadcast %99 : vector<8x1xf32> to vector<8x256xf32>
    %101 = arith.mulf %97, %100 : vector<8x256xf32>
    %c1_108 = arith.constant 1 : index
    %c0_109 = arith.constant 0 : index
    %c0_110 = arith.constant 0 : index
    %102 = vector.load %arg5[%c1_108, %c0_109, %c0_110] : memref<2x8x1xf32, #tpu.memory_space<vmem>>, vector<1x8x1xf32>
    %103 = vector.shape_cast %102 : vector<1x8x1xf32> to vector<8x1xf32>
    %104 = vector.broadcast %103 : vector<8x1xf32> to vector<8x256xf32>
    %105 = arith.addf %101, %104 : vector<8x256xf32>
    %cst_111 = arith.constant 0.000000e+00 : f32
    %106 = vector.broadcast %cst_111 : f32 to vector<8x256xf32>
    %107 = arith.maximumf %105, %106 : vector<8x256xf32>
    %c0_112 = arith.constant 0 : index
    %c0_113 = arith.constant 0 : index
    %c0_114 = arith.constant 0 : index
    %108 = vector.load %arg7[%c0_112, %c0_113, %c0_114] : memref<1x8x256xf32, #tpu.memory_space<vmem>>, vector<1x8x256xf32>
    %109 = vector.shape_cast %108 : vector<1x8x256xf32> to vector<8x256xf32>
    %110 = vector.shape_cast %107 : vector<8x256xf32> to vector<1x8x256xf32>
    tpu.vector_store %arg7[%c0_112, %c0_113, %c0_114], %110 {strides = array<i32>} : memref<1x8x256xf32, #tpu.memory_space<vmem>>, vector<1x8x256xf32>,
    return
  }
  func.func @transform_0(%arg0: i32) -> (i32, i32, i32) {
    %c0_i32 = arith.constant 0 : i32
    %c0_i32_0 = arith.constant 0 : i32
    %c0_i32_1 = arith.constant 0 : i32
    return %arg0, %c0_i32, %c0_i32_0 : i32, i32, i32
  }
  func.func @transform_1(%arg0: i32) -> (i32, i32) {
    %c0_i32 = arith.constant 0 : i32
    %c0_i32_0 = arith.constant 0 : i32
    %c0_i32_1 = arith.constant 0 : i32
    return %c0_i32, %c0_i32_0 : i32, i32
  }
  func.func @transform_2(%arg0: i32) -> (i32, i32, i32) {
    %c0_i32 = arith.constant 0 : i32
    %c0_i32_0 = arith.constant 0 : i32
    %c0_i32_1 = arith.constant 0 : i32
    %c0_i32_2 = arith.constant 0 : i32
    return %c0_i32, %c0_i32_0, %c0_i32_1 : i32, i32, i32
  }
  func.func @transform_3(%arg0: i32) -> (i32, i32) {
    %c0_i32 = arith.constant 0 : i32
    %c0_i32_0 = arith.constant 0 : i32
    %c0_i32_1 = arith.constant 0 : i32
    return %c0_i32, %c0_i32_0 : i32, i32
  }
  func.func @transform_4(%arg0: i32) -> (i32, i32, i32) {
    %c0_i32 = arith.constant 0 : i32
    %c0_i32_0 = arith.constant 0 : i32
    %c0_i32_1 = arith.constant 0 : i32
    %c0_i32_2 = arith.constant 0 : i32
    return %c0_i32, %c0_i32_0, %c0_i32_1 : i32, i32, i32
  }
  func.func @transform_5(%arg0: i32) -> (i32, i32) {
    %c0_i32 = arith.constant 0 : i32
    %c0_i32_0 = arith.constant 0 : i32
    %c0_i32_1 = arith.constant 0 : i32
    return %c0_i32, %c0_i32_0 : i32, i32
  }
  func.func @transform_6(%arg0: i32) -> (i32, i32, i32) {
    %c0_i32 = arith.constant 0 : i32
    %c0_i32_0 = arith.constant 0 : i32
    %c0_i32_1 = arith.constant 0 : i32
    return %arg0, %c0_i32, %c0_i32_0 : i32, i32, i32
  }
}

</mosaic_0001>

<llo_original>
// kernel: conv_block_bn_forward.1
$region0: #{conv_block_bn_forward.1}
  #allocation0 [shape = 'u32[]', space=smem, size = 0x4, offset = 0x4, fixed_abs, tag = 'smem constant byte address 0x4 - core index']
  #allocation1 [shape = 'u32[72,128]{1,0:T(1,128)}', space=vmem, size = 0x9000, scoped, tag = 'internal scratch']
  #allocation2 [shape = 'f32[4,320]{1,0:T(4,128)}', space=vmem, size = 0x1800, scoped, tag = 'scratch operand']
  #allocation3 [shape = 'f32[8,320]{1,0:T(8,128)}', space=vmem, size = 0x3000, scoped, tag = 'scratch operand']
  #allocation4 [shape = 'f32[36,256]{1,0:T(8,128)}', space=vmem, size = 0xa000, scoped, tag = 'scratch operand']
  #allocation5 [shape = 'f32[72,256]{1,0:T(8,128)}', space=vmem, size = 0x12000, scoped, tag = 'scratch operand']
  %s0 = inlined_call_operand.vmem [shape: f32[2,4,256], index: 0, kind: input, shape index: {}]
  %s1 = inlined_call_operand.vmem [shape: bf16[8,36], index: 1, kind: input, shape index: {}]
  %s2 = inlined_call_operand.vmem [shape: f32[2,8,1], index: 2, kind: input, shape index: {}]
  %s3 = inlined_call_operand.vmem [shape: bf16[8,72], index: 3, kind: input, shape index: {}]
  %s4 = inlined_call_operand.vmem [shape: f32[2,8,1], index: 4, kind: input, shape index: {}]
  %s5 = inlined_call_operand.vmem [shape: f32[2,256], index: 5, kind: input, shape index: {}]
  %s6 = inlined_call_operand.vmem [shape: f32[2,8,256], index: 6, kind: output, shape index: {}]
  %s7 = sld [smem:[#allocation0]]
  $region57: #{conv_block_bn_forward.1} parent=0
    _
  %s9 = ssub.s32 1, %s7
  %s10 = scalar_select 0, %s9, %s7
  loop: start=0, step=1, limit=4
  $region2: #{conv_block_bn_forward.1} parent=0 // loop_pre_header
    _
  $region3: #{conv_block_bn_forward.1} parent=0 // loop_header
    %s12 = sphi 0, %s16
    %p13 = scmp.ge.s32.totalorder %s12, 4
    %s22 = sphi 0, %s24
    %s25 = sphi 0, %s22
    %s26 = sphi 0, %s25
    %s42 = sphi 0, %s26
    %s46 = sphi 0, %s46
    %s48 = sphi 0, %s46
    %s49 = sphi 0, %s48
    %s63 = sphi 0, %s49
    %s67 = sphi 0, %s67
    %s69 = sphi 0, %s67
    %s70 = sphi 0, %s69
    %s84 = sphi 0, %s70
    %s88 = sphi 0, %s88
    %s90 = sphi 0, %s88
    %s91 = sphi 0, %s90
    %s105 = sphi 0, %s91
    %s109 = sphi 0, %s109
    %s111 = sphi 0, %s109
    %s112 = sphi 0, %s111
    %s126 = sphi 0, %s112
    %s130 = sphi 0, %s130
    %s132 = sphi 0, %s130
    %s133 = sphi 0, %s132
    %s147 = sphi 0, %s133
    %s153 = sphi 0, %s155
    %s156 = sphi 0, %s153
    %s157 = sphi 0, %s156
    %s173 = sphi 0, %s157
  $region4: #{conv_block_bn_forward.1} parent=0 // loop_header_branch
    %15 = sbr.rel (%p13) target = $region8
  $region5: #{conv_block_bn_forward.1} parent=0 // loop_body
    %s17 = ssub.s32 %s12, 1
    %s18 = ssub.s32 %s12, 2
    %s19 = sadd.s32 %s12, 1
    %s20 = ssub.s32 %s12, %s19
    %p21 = scmp.eq.s32.totalorder %s20, 0
    %s23 = sadd.s32 %s22, 1
    %s24 = scalar_select %p21, %s22, %s23
    %p27 = pneg %p21
    %p28 = scmp.eq.s32.totalorder %s12, 1
    %p29 = por %p27, %p28
    %p30 = scmp.ne.s32.totalorder %s22, %s25
    %p31 = scmp.eq.s32.totalorder %s12, 0
    %p32 = por %p30, %p31
    %p33 = scmp.ne.s32.totalorder %s22, %s25
    %p34 = scmp.eq.s32.totalorder %s17, 1
    %p35 = por %p33, %p34
    %p36 = scmp.ne.s32.totalorder %s25, %s26
    %p37 = scmp.eq.s32.totalorder %s17, 0
    %p38 = por %p36, %p37
    %p39 = scmp.ne.s32.totalorder %s25, %s26
    %p40 = scmp.eq.s32.totalorder %s18, 1
    %p41 = por %p39, %p40
    %p43 = scmp.ne.s32.totalorder %s26, %s42
    %p44 = scmp.eq.s32.totalorder %s18, 0
    %p45 = por %p43, %p44
    %s47 = sadd.s32 %s46, 1
    %p50 = scmp.eq.s32.totalorder %s12, 1
    %p51 = scmp.ne.s32.totalorder %s46, %s48
    %p52 = scmp.eq.s32.totalorder %s12, 0
    %p53 = por %p51, %p52
    %p54 = scmp.ne.s32.totalorder %s46, %s48
    %p55 = scmp.eq.s32.totalorder %s17, 1
    %p56 = por %p54, %p55
    %p57 = scmp.ne.s32.totalorder %s48, %s49
    %p58 = scmp.eq.s32.totalorder %s17, 0
    %p59 = por %p57, %p58
    %p60 = scmp.ne.s32.totalorder %s48, %s49
    %p61 = scmp.eq.s32.totalorder %s18, 1
    %p62 = por %p60, %p61
    %p64 = scmp.ne.s32.totalorder %s49, %s63
    %p65 = scmp.eq.s32.totalorder %s18, 0
    %p66 = por %p64, %p65
    %s68 = sadd.s32 %s67, 1
    %p71 = scmp.eq.s32.totalorder %s12, 1
    %p72 = scmp.ne.s32.totalorder %s67, %s69
    %p73 = scmp.eq.s32.totalorder %s12, 0
    %p74 = por %p72, %p73
    %p75 = scmp.ne.s32.totalorder %s67, %s69
    %p76 = scmp.eq.s32.totalorder %s17, 1
    %p77 = por %p75, %p76
    %p78 = scmp.ne.s32.totalorder %s69, %s70
    %p79 = scmp.eq.s32.totalorder %s17, 0
    %p80 = por %p78, %p79
    %p81 = scmp.ne.s32.totalorder %s69, %s70
    %p82 = scmp.eq.s32.totalorder %s18, 1
    %p83 = por %p81, %p82
    %p85 = scmp.ne.s32.totalorder %s70, %s84
    %p86 = scmp.eq.s32.totalorder %s18, 0
    %p87 = por %p85, %p86
    %s89 = sadd.s32 %s88, 1
    %p92 = scmp.eq.s32.totalorder %s12, 1
    %p93 = scmp.ne.s32.totalorder %s88, %s90
    %p94 = scmp.eq.s32.totalorder %s12, 0
    %p95 = por %p93, %p94
    %p96 = scmp.ne.s32.totalorder %s88, %s90
    %p97 = scmp.eq.s32.totalorder %s17, 1
    %p98 = por %p96, %p97
    %p99 = scmp.ne.s32.totalorder %s90, %s91
    %p100 = scmp.eq.s32.totalorder %s17, 0
    %p101 = por %p99, %p100
    %p102 = scmp.ne.s32.totalorder %s90, %s91
    %p103 = scmp.eq.s32.totalorder %s18, 1
    %p104 = por %p102, %p103
    %p106 = scmp.ne.s32.totalorder %s91, %s105
    %p107 = scmp.eq.s32.totalorder %s18, 0
    %p108 = por %p106, %p107
    %s110 = sadd.s32 %s109, 1
    %p113 = scmp.eq.s32.totalorder %s12, 1
    %p114 = scmp.ne.s32.totalorder %s109, %s111
    %p115 = scmp.eq.s32.totalorder %s12, 0
    %p116 = por %p114, %p115
    %p117 = scmp.ne.s32.totalorder %s109, %s111
    %p118 = scmp.eq.s32.totalorder %s17, 1
    %p119 = por %p117, %p118
    %p120 = scmp.ne.s32.totalorder %s111, %s112
    %p121 = scmp.eq.s32.totalorder %s17, 0
    %p122 = por %p120, %p121
    %p123 = scmp.ne.s32.totalorder %s111, %s112
    %p124 = scmp.eq.s32.totalorder %s18, 1
    %p125 = por %p123, %p124
    %p127 = scmp.ne.s32.totalorder %s112, %s126
    %p128 = scmp.eq.s32.totalorder %s18, 0
    %p129 = por %p127, %p128
    %s131 = sadd.s32 %s130, 1
    %p134 = scmp.eq.s32.totalorder %s12, 1
    %p135 = scmp.ne.s32.totalorder %s130, %s132
    %p136 = scmp.eq.s32.totalorder %s12, 0
    %p137 = por %p135, %p136
    %p138 = scmp.ne.s32.totalorder %s130, %s132
    %p139 = scmp.eq.s32.totalorder %s17, 1
    %p140 = por %p138, %p139
    %p141 = scmp.ne.s32.totalorder %s132, %s133
    %p142 = scmp.eq.s32.totalorder %s17, 0
    %p143 = por %p141, %p142
    %p144 = scmp.ne.s32.totalorder %s132, %s133
    %p145 = scmp.eq.s32.totalorder %s18, 1
    %p146 = por %p144, %p145
    %p148 = scmp.ne.s32.totalorder %s133, %s147
    %p149 = scmp.eq.s32.totalorder %s18, 0
    %p150 = por %p148, %p149
    %s151 = ssub.s32 %s12, %s19
    %p152 = scmp.eq.s32.totalorder %s151, 0
    %s154 = sadd.s32 %s153, 1
    %s155 = scalar_select %p152, %s153, %s154
    %p158 = pneg %p152
    %p159 = scmp.eq.s32.totalorder %s12, 1
    %p160 = por %p158, %p159
    %p161 = scmp.ne.s32.totalorder %s153, %s156
    %p162 = scmp.eq.s32.totalorder %s12, 0
    %p163 = por %p161, %p162
    %p164 = scmp.ne.s32.totalorder %s153, %s156
    %p165 = scmp.eq.s32.totalorder %s17, 1
    %p166 = por %p164, %p165
    %p167 = scmp.ne.s32.totalorder %s156, %s157
    %p168 = scmp.eq.s32.totalorder %s17, 0
    %p169 = por %p167, %p168
    %p170 = scmp.ne.s32.totalorder %s156, %s157
    %p171 = scmp.eq.s32.totalorder %s18, 1
    %p172 = por %p170, %p171
    %p174 = scmp.ne.s32.totalorder %s157, %s173
    %p175 = scmp.eq.s32.totalorder %s18, 0
    %p176 = por %p174, %p175
    %p177 = scmp.le.s32.totalorder 1, %s12
    %p178 = scmp.lt.s32.totalorder %s12, 3
    %p179 = pnand %p177, %p178
    %p180 = pneg %p179
    // Predicated region
    $region9: #{conv_block_bn_forward.1} parent=5 // pred_check
      _
    $region10: #{conv_block_bn_forward.1} parent=5 // pred_check_branch
      %182 = sbr.rel (%p179) target = $region12
    $region11: #{conv_block_bn_forward.1} parent=5 // pred_region
      %s183 = ssub.s32 %s12, 1
      // Predicated region
      $region13: #{conv_block_bn_forward.1} parent=11 // pred_check
        %p184 = pneg %p59
      $region14: #{conv_block_bn_forward.1} parent=11 // pred_check_branch
        %186 = sbr.rel (%p184) target = $region16
      $region15: #{conv_block_bn_forward.1} parent=11 // pred_region
        _
      $region16: #{conv_block_bn_forward.1} parent=11 // pred_fallthru
        _
      // Predicated region
      $region17: #{conv_block_bn_forward.1} parent=11 // pred_check
        %p187 = pneg %p80
      $region18: #{conv_block_bn_forward.1} parent=11 // pred_check_branch
        %189 = sbr.rel (%p187) target = $region20
      $region19: #{conv_block_bn_forward.1} parent=11 // pred_region
        _
      $region20: #{conv_block_bn_forward.1} parent=11 // pred_fallthru
        _
      // Predicated region
      $region21: #{conv_block_bn_forward.1} parent=11 // pred_check
        %p190 = pneg %p101
      $region22: #{conv_block_bn_forward.1} parent=11 // pred_check_branch
        %192 = sbr.rel (%p190) target = $region24
      $region23: #{conv_block_bn_forward.1} parent=11 // pred_region
        _
      $region24: #{conv_block_bn_forward.1} parent=11 // pred_fallthru
        _
      // Predicated region
      $region25: #{conv_block_bn_forward.1} parent=11 // pred_check
        %p193 = pneg %p122
      $region26: #{conv_block_bn_forward.1} parent=11 // pred_check_branch
        %195 = sbr.rel (%p193) target = $region28
      $region27: #{conv_block_bn_forward.1} parent=11 // pred_region
        _
      $region28: #{conv_block_bn_forward.1} parent=11 // pred_fallthru
        _
      // Predicated region
      $region29: #{conv_block_bn_forward.1} parent=11 // pred_check
        %p196 = pneg %p143
      $region30: #{conv_block_bn_forward.1} parent=11 // pred_check_branch
        %198 = sbr.rel (%p196) target = $region32
      $region31: #{conv_block_bn_forward.1} parent=11 // pred_region
        _
      $region32: #{conv_block_bn_forward.1} parent=11 // pred_fallthru
        _
    $region12: #{conv_block_bn_forward.1} parent=5 // pred_fallthru
      _
    %p199 = scmp.lt.s32.totalorder %s12, 2
    // Predicated region
    $region33: #{conv_block_bn_forward.1} parent=5 // pred_check
      %p200 = pneg %p199
    $region34: #{conv_block_bn_forward.1} parent=5 // pred_check_branch
      %202 = sbr.rel (%p200) target = $region36
    $region35: #{conv_block_bn_forward.1} parent=5 // pred_region
      // Predicated region
      $region37: #{conv_block_bn_forward.1} parent=35 // pred_check
        %p203 = pneg %p32
      $region38: #{conv_block_bn_forward.1} parent=35 // pred_check_branch
        %205 = sbr.rel (%p203) target = $region40
      $region39: #{conv_block_bn_forward.1} parent=35 // pred_region
        %p206 = scmp.lt.s32.totalorder %s12, 1
        %s207 = scalar_select %p206, %s12, 1
        %s208 = smul.addr %s207, 2
        %s209 = smul.addr %s208, 4
        %s210 = scalar_lea.vmem %s0, %s209
      $region40: #{conv_block_bn_forward.1} parent=35 // pred_fallthru
        _
    $region36: #{conv_block_bn_forward.1} parent=5 // pred_fallthru
      _
    %p211 = scmp.le.s32.totalorder 1, %s12
    %p212 = scmp.lt.s32.totalorder %s12, 3
    %p213 = pnand %p211, %p212
    %p214 = pneg %p213
    // Predicated region
    $region41: #{conv_block_bn_forward.1} parent=5 // pred_check
      _
    $region42: #{conv_block_bn_forward.1} parent=5 // pred_check_branch
      %216 = sbr.rel (%p213) target = $region44
    $region43: #{conv_block_bn_forward.1} parent=5 // pred_region
      %s217 = ssub.s32 %s12, 1
      %p218 = scmp.lt.s32.totalorder %s17, 1
      %s219 = scalar_select %p218, %s17, 1
      %s220 = smul.addr %s219, 2
      %s221 = smul.addr %s220, 4
      %s222 = scalar_lea.vmem %s0, %s221
      %p223 = pneg %p38
      %p224 = pneg %p35
      %p225 = pneg %p59
      %p226 = pneg %p56
      %p227 = pneg %p80
      %p228 = pneg %p77
      %p229 = pneg %p101
      %p230 = pneg %p98
      %p231 = pneg %p122
      %p232 = pneg %p119
      %p233 = pneg %p143
      %p234 = pneg %p140
      %p235 = pneg %p169
      %p236 = pneg %p166
      %p237 = scmp.lt.s32.totalorder %s17, 1
      %s238 = scalar_select %p237, %s17, 1
      %s239 = smul.addr %s238, 2
      %s240 = smul.addr %s239, 8
      %s241 = scalar_lea.vmem %s6, %s240
      %p242 = scmp.lt.s32.totalorder %s17, 1
      %s243 = scalar_select %p242, %s17, 1
      %s244 = smul.addr %s243, 2
      %s245 = smul.addr %s244, 4
      %s246 = scalar_lea.vmem %s0, %s245
      %p247 = scmp.lt.s32.totalorder %s17, 1
      %s248 = scalar_select %p247, %s17, 1
      %s249 = smul.addr %s248, 2
      %s250 = smul.addr %s249, 8
      %s251 = scalar_lea.vmem %s6, %s250
      %253 = vst [vmem:[#allocation2] sm:$0xff] 0.0
      %vm254 = vcmask 519168
      %255 = vst.msk [vmem:[#allocation2 + $0x8] sm:$0xf] %vm254, 0.0
      %256 = vst [vmem:[#allocation3] sm:$0xff] 0.0
      %257 = vst [vmem:[#allocation3 + $0x8] sm:$0xff] 0.0
      %vm258 = vcmask 523264
      %259 = vst.msk [vmem:[#allocation3 + $0x10] sm:$0xff] %vm258, 0.0
      %v260 = vld [vmem:[%s246] sm:$0xff]
      %262 = vrot.lane.b32.xlu0 %v260, 32
      %v263 = vpop.permute.xlu0 %262
      %v264 = vrot.slane %v263, 4
      %vm265 = vcmask 261120
      %v266 = vsel %vm265, %v264, %v263
      %vm269 = vcmask 1043712
      %vm270 = vcmask 1047556
      %vm271 = vmor %vm270, %vm269
      %272 = vst.msk [vmem:[#allocation2] sm:$0xff] %vm271, %v266
      %vm273 = vcmask 257024
      %274 = vst.msk [vmem:[#allocation2 + $0x8] sm:$0xf] %vm273, %v264
      %v275 = vld [vmem:[#allocation2] sm:$0xff]
      %v276 = vld [vmem:[#allocation2 + $0x8] sm:$0xf]
      %v277 = vld [vmem:[%s5] ss:$2 sm:$0x3]
      %v279 = vperm.slane %v277, 0
      %v280 = vperm.slane %v277, 1
      %v281 = vrot.slane %v280, 4
      %vm282 = vcmask 1043456
      %v283 = vsel %vm282, %v279, %v281
      %284 = vrot.lane.b32.xlu0 %v283, 15
      %v285 = vpop.permute.xlu0 %284
      %v286 = vrot.slane %v285, 4
      %vm287 = vcmask 121856
      %v288 = vsel %vm287, %v286, %v285
      %v291 = vmul.f32 %v275, %v288
      %v292 = vmul.f32 %v276, %v286
      %295 = vst [vmem:[#allocation1] ss:$2 sm:$0xff] %v291
      %s296 = scalar_lea.vmem [#allocation1], 16
      %297 = vst [vmem:[%s296] ss:$2 sm:$0xff] %v292
      %v298 = vld.sshfl [vmem:[#allocation1] sm:$0xff pattern:$0x75316420]
      %v299 = vld.sshfl [vmem:[#allocation1 + $0x8] sm:$0xff pattern:$0x75316420]
      %v300 = vld.sshfl [vmem:[#allocation1 + $0x10] sm:$0xff pattern:$0x75316420]
      %301 = vrot.lane.b32.xlu0 %v298, 113
      %v302 = vpop.permute.xlu0 %301
      %303 = vrot.lane.b32.xlu0 %v299, 113
      %v304 = vpop.permute.xlu0 %303
      %305 = vrot.lane.b32.xlu0 %v300, 113
      %v306 = vpop.permute.xlu0 %305
      %vm307 = vcmask 924672
      %v308 = vsel %vm307, %v302, %v304
      %v309 = vsel %vm307, %v304, %v306
      %312 = vst [vmem:[#allocation4] sm:$0xf] %v308
      %313 = vst [vmem:[#allocation4 + $0x8] sm:$0xf] %v309
      %v314 = vld [vmem:[#allocation2] sm:$0xff]
      %v315 = vld [vmem:[#allocation2 + $0x8] sm:$0xf]
      %s318 = scalar_lea.vmem [#allocation1], 1
      %319 = vst [vmem:[%s318] ss:$2 sm:$0xff] %v314
      %s320 = scalar_lea.vmem [#allocation1], 17
      %321 = vst [vmem:[%s320] ss:$2 sm:$0xff] %v315
      %v322 = vld.sshfl [vmem:[#allocation1] sm:$0xff pattern:$0x75316420]
      %v323 = vld.sshfl [vmem:[#allocation1 + $0x8] sm:$0xff pattern:$0x75316420]
      %v324 = vld.sshfl [vmem:[#allocation1 + $0x10] sm:$0xff pattern:$0x75316420]
      %325 = vrot.lane.b32.xlu0 %v322, 112
      %v326 = vpop.permute.xlu0 %325
      %327 = vrot.lane.b32.xlu0 %v323, 112
      %v328 = vpop.permute.xlu0 %327
      %329 = vrot.lane.b32.xlu0 %v324, 112
      %v330 = vpop.permute.xlu0 %329
      %vm331 = vcmask 916480
      %v332 = vsel %vm331, %v326, %v328
      %v333 = vsel %vm331, %v328, %v330
      %336 = vst [vmem:[#allocation4] sm:$0xf0] %v332
      %337 = vst [vmem:[#allocation4 + $0x8] sm:$0xf0] %v333
      %v338 = vld [vmem:[#allocation2] sm:$0xff]
      %v339 = vld [vmem:[#allocation2 + $0x8] sm:$0xf]
      %s340 = scalar_lea.vmem %s5, 1
      %v341 = vld [vmem:[%s340] ss:$2 sm:$0x3]
      %v343 = vperm.slane %v341, 0
      %v344 = vperm.slane %v341, 1
      %v345 = vrot.slane %v344, 4
      %v346 = vsel %vm282, %v343, %v345
      %347 = vrot.lane.b32.xlu0 %v346, 17
      %v348 = vpop.permute.xlu0 %347
      %v349 = vrot.slane %v348, 4
      %vm350 = vcmask 138240
      %v351 = vsel %vm350, %v349, %v348
      %v354 = vmul.f32 %v338, %v351
      %v355 = vmul.f32 %v339, %v349
      %358 = vst [vmem:[#allocation1] ss:$2 sm:$0xff] %v354
      %s359 = scalar_lea.vmem [#allocation1], 16
      %360 = vst [vmem:[%s359] ss:$2 sm:$0xff] %v355
      %v361 = vld.sshfl [vmem:[#allocation1] sm:$0xff pattern:$0x75316420]
      %v362 = vld.sshfl [vmem:[#allocation1 + $0x8] sm:$0xff pattern:$0x75316420]
      %v363 = vld.sshfl [vmem:[#allocation1 + $0x10] sm:$0xff pattern:$0x75316420]
      %364 = vrot.lane.b32.xlu0 %v361, 111
      %v365 = vpop.permute.xlu0 %364
      %366 = vrot.lane.b32.xlu0 %v362, 111
      %v367 = vpop.permute.xlu0 %366
      %368 = vrot.lane.b32.xlu0 %v363, 111
      %v369 = vpop.permute.xlu0 %368
      %vm370 = vcmask 908288
      %v371 = vsel %vm370, %v365, %v367
      %v372 = vsel %vm370, %v367, %v369
      %375 = vst [vmem:[#allocation4 + $0x10] sm:$0xf] %v371
      %376 = vst [vmem:[#allocation4 + $0x18] sm:$0xf] %v372
      %v377 = vld [vmem:[#allocation2] sm:$0xff]
      %v378 = vld [vmem:[#allocation2 + $0x8] sm:$0xf]
      %v379 = vld [vmem:[%s5] ss:$2 sm:$0x3]
      %v381 = vperm.slane %v379, 0
      %v382 = vperm.slane %v379, 1
      %v383 = vrot.slane %v382, 4
      %v384 = vsel %vm282, %v381, %v383
      %385 = vrot.lane.b32.xlu0 %v384, 31
      %v386 = vpop.permute.xlu0 %385
      %v387 = vrot.slane %v386, 4
      %vm388 = vcmask 252928
      %v389 = vsel %vm388, %v387, %v386
      %v392 = vmul.f32 %v377, %v389
      %v393 = vmul.f32 %v378, %v387
      %s396 = scalar_lea.vmem [#allocation1], 1
      %397 = vst [vmem:[%s396] ss:$2 sm:$0xff] %v392
      %s398 = scalar_lea.vmem [#allocation1], 17
      %399 = vst [vmem:[%s398] ss:$2 sm:$0xff] %v393
      %v400 = vld.sshfl [vmem:[#allocation1] sm:$0xff pattern:$0x75316420]
      %v401 = vld.sshfl [vmem:[#allocation1 + $0x8] sm:$0xff pattern:$0x75316420]
      %v402 = vld.sshfl [vmem:[#allocation1 + $0x10] sm:$0xff pattern:$0x75316420]
      %403 = vrot.lane.b32.xlu0 %v400, 97
      %v404 = vpop.permute.xlu0 %403
      %405 = vrot.lane.b32.xlu0 %v401, 97
      %v406 = vpop.permute.xlu0 %405
      %407 = vrot.lane.b32.xlu0 %v402, 97
      %v408 = vpop.permute.xlu0 %407
      %vm409 = vcmask 793600
      %v410 = vsel %vm409, %v404, %v406
      %v411 = vsel %vm409, %v406, %v408
      %414 = vst [vmem:[#allocation4 + $0x10] sm:$0xf0] %v410
      %415 = vst [vmem:[#allocation4 + $0x18] sm:$0xf0] %v411
      %v416 = vld [vmem:[#allocation2] sm:$0xff]
      %v417 = vld [vmem:[#allocation2 + $0x8] sm:$0xf]
      %420 = vst [vmem:[#allocation1] ss:$2 sm:$0xff] %v416
      %s421 = scalar_lea.vmem [#allocation1], 16
      %422 = vst [vmem:[%s421] ss:$2 sm:$0xff] %v417
      %v423 = vld.sshfl [vmem:[#allocation1] sm:$0xff pattern:$0x75316420]
      %v424 = vld.sshfl [vmem:[#allocation1 + $0x8] sm:$0xff pattern:$0x75316420]
      %v425 = vld.sshfl [vmem:[#allocation1 + $0x10] sm:$0xff pattern:$0x75316420]
      %426 = vrot.lane.b32.xlu0 %v423, 96
      %v427 = vpop.permute.xlu0 %426
      %428 = vrot.lane.b32.xlu0 %v424, 96
      %v429 = vpop.permute.xlu0 %428
      %430 = vrot.lane.b32.xlu0 %v425, 96
      %v431 = vpop.permute.xlu0 %430
      %vm432 = vcmask 785408
      %v433 = vsel %vm432, %v427, %v429
      %v434 = vsel %vm432, %v429, %v431
      %437 = vst [vmem:[#allocation4 + $0x20] sm:$0xf] %v433
      %438 = vst [vmem:[#allocation4 + $0x28] sm:$0xf] %v434
      %v439 = vld [vmem:[#allocation2] sm:$0xff]
      %v440 = vld [vmem:[#allocation2 + $0x8] sm:$0xf]
      %v441 = vld [vmem:[%s340] ss:$2 sm:$0x3]
      %v443 = vperm.slane %v441, 0
      %v444 = vperm.slane %v441, 1
      %v445 = vrot.slane %v444, 4
      %v446 = vsel %vm282, %v443, %v445
      %447 = vrot.lane.b32.xlu0 %v446, 33
      %v448 = vpop.permute.xlu0 %447
      %v449 = vrot.slane %v448, 4
      %vm450 = vcmask 269312
      %v451 = vsel %vm450, %v449, %v448
      %v454 = vmul.f32 %v439, %v451
      %v455 = vmul.f32 %v440, %v449
      %s458 = scalar_lea.vmem [#allocation1], 1
      %459 = vst [vmem:[%s458] ss:$2 sm:$0xff] %v454
      %s460 = scalar_lea.vmem [#allocation1], 17
      %461 = vst [vmem:[%s460] ss:$2 sm:$0xff] %v455
      %v462 = vld.sshfl [vmem:[#allocation1] sm:$0xff pattern:$0x75316420]
      %v463 = vld.sshfl [vmem:[#allocation1 + $0x8] sm:$0xff pattern:$0x75316420]
      %v464 = vld.sshfl [vmem:[#allocation1 + $0x10] sm:$0xff pattern:$0x75316420]
      %465 = vrot.lane.b32.xlu0 %v462, 95
      %v466 = vpop.permute.xlu0 %465
      %467 = vrot.lane.b32.xlu0 %v463, 95
      %v468 = vpop.permute.xlu0 %467
      %469 = vrot.lane.b32.xlu0 %v464, 95
      %v470 = vpop.permute.xlu0 %469
      %vm471 = vcmask 777216
      %v472 = vsel %vm471, %v466, %v468
      %v473 = vsel %vm471, %v468, %v470
      %476 = vst [vmem:[#allocation4 + $0x20] sm:$0xf0] %v472
      %477 = vst [vmem:[#allocation4 + $0x28] sm:$0xf0] %v473
      %v478 = vld [vmem:[#allocation2] sm:$0xff]
      %v479 = vld [vmem:[#allocation2 + $0x8] sm:$0xf]
      %v480 = vld [vmem:[%s5] ss:$2 sm:$0x3]
      %v482 = vperm.slane %v480, 0
      %v483 = vperm.slane %v480, 1
      %v484 = vrot.slane %v483, 4
      %v485 = vsel %vm282, %v482, %v484
      %486 = vrot.lane.b32.xlu0 %v485, 47
      %v487 = vpop.permute.xlu0 %486
      %v488 = vrot.slane %v487, 4
      %vm489 = vcmask 384000
      %v490 = vsel %vm489, %v488, %v487
      %v493 = vmul.f32 %v478, %v490
      %v494 = vmul.f32 %v479, %v488
      %497 = vst [vmem:[#allocation1] ss:$2 sm:$0xff] %v493
      %s498 = scalar_lea.vmem [#allocation1], 16
      %499 = vst [vmem:[%s498] ss:$2 sm:$0xff] %v494
      %v500 = vld.sshfl [vmem:[#allocation1] sm:$0xff pattern:$0x75316420]
      %v501 = vld.sshfl [vmem:[#allocation1 + $0x8] sm:$0xff pattern:$0x75316420]
      %v502 = vld.sshfl [vmem:[#allocation1 + $0x10] sm:$0xff pattern:$0x75316420]
      %503 = vrot.lane.b32.xlu0 %v500, 81
      %v504 = vpop.permute.xlu0 %503
      %505 = vrot.lane.b32.xlu0 %v501, 81
      %v506 = vpop.permute.xlu0 %505
      %507 = vrot.lane.b32.xlu0 %v502, 81
      %v508 = vpop.permute.xlu0 %507
      %vm509 = vcmask 662528
      %v510 = vsel %vm509, %v504, %v506
      %v511 = vsel %vm509, %v506, %v508
      %514 = vst [vmem:[#allocation4 + $0x30] sm:$0xf] %v510
      %515 = vst [vmem:[#allocation4 + $0x38] sm:$0xf] %v511
      %v516 = vld [vmem:[#allocation2] sm:$0xff]
      %v517 = vld [vmem:[#allocation2 + $0x8] sm:$0xf]
      %s520 = scalar_lea.vmem [#allocation1], 1
      %521 = vst [vmem:[%s520] ss:$2 sm:$0xff] %v516
      %s522 = scalar_lea.vmem [#allocation1], 17
      %523 = vst [vmem:[%s522] ss:$2 sm:$0xff] %v517
      %v524 = vld.sshfl [vmem:[#allocation1] sm:$0xff pattern:$0x75316420]
      %v525 = vld.sshfl [vmem:[#allocation1 + $0x8] sm:$0xff pattern:$0x75316420]
      %v526 = vld.sshfl [vmem:[#allocation1 + $0x10] sm:$0xff pattern:$0x75316420]
      %527 = vrot.lane.b32.xlu0 %v524, 80
      %v528 = vpop.permute.xlu0 %527
      %529 = vrot.lane.b32.xlu0 %v525, 80
      %v530 = vpop.permute.xlu0 %529
      %531 = vrot.lane.b32.xlu0 %v526, 80
      %v532 = vpop.permute.xlu0 %531
      %vm533 = vcmask 654336
      %v534 = vsel %vm533, %v528, %v530
      %v535 = vsel %vm533, %v530, %v532
      %538 = vst [vmem:[#allocation4 + $0x30] sm:$0xf0] %v534
      %539 = vst [vmem:[#allocation4 + $0x38] sm:$0xf0] %v535
      %v540 = vld [vmem:[#allocation2] sm:$0xff]
      %v541 = vld [vmem:[#allocation2 + $0x8] sm:$0xf]
      %v542 = vld [vmem:[%s340] ss:$2 sm:$0x3]
      %v544 = vperm.slane %v542, 0
      %v545 = vperm.slane %v542, 1
      %v546 = vrot.slane %v545, 4
      %v547 = vsel %vm282, %v544, %v546
      %548 = vrot.lane.b32.xlu0 %v547, 49
      %v549 = vpop.permute.xlu0 %548
      %v550 = vrot.slane %v549, 4
      %vm551 = vcmask 400384
      %v552 = vsel %vm551, %v550, %v549
      %v555 = vmul.f32 %v540, %v552
      %v556 = vmul.f32 %v541, %v550
      %559 = vst [vmem:[#allocation1] ss:$2 sm:$0xff] %v555
      %s560 = scalar_lea.vmem [#allocation1], 16
      %561 = vst [vmem:[%s560] ss:$2 sm:$0xff] %v556
      %v562 = vld.sshfl [vmem:[#allocation1] sm:$0xff pattern:$0x75316420]
      %v563 = vld.sshfl [vmem:[#allocation1 + $0x8] sm:$0xff pattern:$0x75316420]
      %v564 = vld.sshfl [vmem:[#allocation1 + $0x10] sm:$0xff pattern:$0x75316420]
      %565 = vrot.lane.b32.xlu0 %v562, 79
      %v566 = vpop.permute.xlu0 %565
      %567 = vrot.lane.b32.xlu0 %v563, 79
      %v568 = vpop.permute.xlu0 %567
      %569 = vrot.lane.b32.xlu0 %v564, 79
      %v570 = vpop.permute.xlu0 %569
      %vm571 = vcmask 646144
      %v572 = vsel %vm571, %v566, %v568
      %v573 = vsel %vm571, %v568, %v570
      %576 = vst [vmem:[#allocation4 + $0x40] sm:$0xf] %v572
      %577 = vst [vmem:[#allocation4 + $0x48] sm:$0xf] %v573
      %v578 = vld [vmem:[%s1] sm:$0xf]
      %v579 = vld [vmem:[#allocation4] sm:$0xff]
      %v580 = vld [vmem:[#allocation4 + $0x8] sm:$0xff]
      %v581 = vld [vmem:[#allocation4 + $0x10] sm:$0xff]
      %v582 = vld [vmem:[#allocation4 + $0x18] sm:$0xff]
      %v583 = vld [vmem:[#allocation4 + $0x20] sm:$0xff]
      %v584 = vld [vmem:[#allocation4 + $0x28] sm:$0xff]
      %v585 = vld [vmem:[#allocation4 + $0x30] sm:$0xff]
      %v586 = vld [vmem:[#allocation4 + $0x38] sm:$0xff]
      %v587 = vld [vmem:[#allocation4 + $0x40] sm:$0xf]
      %v588 = vld [vmem:[#allocation4 + $0x48] sm:$0xf]
      %v589 = vpack.c.bf16 %v581, %v579
      %v590 = vpack.c.bf16 %v582, %v580
      %v591 = vpack.c.bf16 %v585, %v583
      %v592 = vpack.c.bf16 %v586, %v584
      %v593 = vpack.c.bf16 %v587, %v587
      %v594 = vpack.c.bf16 %v588, %v588
      %vm595 = vcmask 293888
      %v597 = vsel %vm595, %v578, 0
      %vm599 = vcmask 1041408
      %v601 = vsel %vm599, %v593, 0
      %v604 = vsel %vm599, %v594, 0
      %606 = vmatpush.bf16.msra.mxu0 0
      %607 = vmatpush.bf16.msra.mxu0 0
      %608 = vmatpush.bf16.msra.mxu0 0
      %609 = vmatpush.bf16.msra.mxu0 0
      %610 = vmatpush.bf16.msra.mxu0 0
      %611 = vmatpush.bf16.msra.mxu0 %v601
      %612 = vmatpush.bf16.msra.mxu0 %v591
      %613 = vmatpush.bf16.msra.mxu0 %v589
      %614 = vmatmul.bf16.gmra.mxu0 %v597
      %v615 = vpop.f32.mrf.mxu0
      %v616 = vadd.f32 0.0, %v615
      %v617 = vpop.f32.mrf.mxu0
      %618 = vdwg.mxu0
      %619 = vmatpush.bf16.msra.mxu0 0
      %620 = vmatpush.bf16.msra.mxu0 0
      %621 = vmatpush.bf16.msra.mxu0 0
      %622 = vmatpush.bf16.msra.mxu0 0
      %623 = vmatpush.bf16.msra.mxu0 0
      %624 = vmatpush.bf16.msra.mxu0 %v604
      %625 = vmatpush.bf16.msra.mxu0 %v592
      %626 = vmatpush.bf16.msra.mxu0 %v590
      %627 = vmatmul.bf16.gmra.mxu0 %v597
      %v628 = vpop.f32.mrf.mxu0
      %v629 = vadd.f32 0.0, %v628
      %v630 = vpop.f32.mrf.mxu0
      %631 = vdwg.mxu0
      %v632 = vld [vmem:[%s2] sm:$0xff]
      %634 = vset.pattern.permute.xlu0 0
      %635 = vperm.xlu0 %634, %v632
      %v636 = vpop.permute.xlu0 %635
      %v638 = vmul.f32 %v616, %v636
      %v639 = vmul.f32 %v629, %v636
      %s640 = scalar_lea.vmem %s2, 8
      %v641 = vld [vmem:[%s640] sm:$0xff]
      %643 = vset.pattern.permute.xlu0 0
      %644 = vperm.xlu0 %643, %v641
      %v645 = vpop.permute.xlu0 %644
      %v647 = vadd.f32 %v638, %v645
      %v648 = vadd.f32 %v639, %v645
      %v649 = vmax.f32 %v647, 0.0
      %v650 = vmax.f32 %v648, 0.0
      %653 = vrot.lane.b32.xlu0 %v649, 32
      %v654 = vpop.permute.xlu0 %653
      %655 = vrot.lane.b32.xlu0 %v650, 32
      %v656 = vpop.permute.xlu0 %655
      %v657 = vsel %vm265, %v654, %v656
      %vm661 = vcmask 1047808
      %662 = vst.msk [vmem:[#allocation3] sm:$0xff] %vm661, %v654
      %663 = vst [vmem:[#allocation3 + $0x8] sm:$0xff] %v657
      %664 = vst.msk [vmem:[#allocation3 + $0x10] sm:$0xff] %vm265, %v656
      %v665 = vld [vmem:[#allocation3] sm:$0xff]
      %v666 = vld [vmem:[#allocation3 + $0x8] sm:$0xff]
      %v667 = vld [vmem:[#allocation3 + $0x10] sm:$0xff]
      %v668 = vld [vmem:[%s5] ss:$2 sm:$0x3]
      %v670 = vperm.slane %v668, 0
      %v671 = vperm.slane %v668, 1
      %672 = vrot.lane.b32.xlu0 %v670, 15
      %v673 = vpop.permute.xlu0 %672
      %674 = vrot.lane.b32.xlu0 %v671, 15
      %v675 = vpop.permute.xlu0 %674
      %v676 = vsel %vm287, %v673, %v675
      %v680 = vmul.f32 %v665, %v673
      %v681 = vmul.f32 %v666, %v676
      %v682 = vmul.f32 %v667, %v675
      %686 = vrot.lane.b32.xlu0 %v680, 113
      %v687 = vpop.permute.xlu0 %686
      %688 = vrot.lane.b32.xlu0 %v681, 113
      %v689 = vpop.permute.xlu0 %688
      %690 = vrot.lane.b32.xlu0 %v682, 113
      %v691 = vpop.permute.xlu0 %690
      %v692 = vsel %vm307, %v687, %v689
      %v693 = vsel %vm307, %v689, %v691
      %696 = vst [vmem:[#allocation5] sm:$0xff] %v692
      %697 = vst [vmem:[#allocation5 + $0x8] sm:$0xff] %v693
      %v698 = vld [vmem:[#allocation3] sm:$0xff]
      %v699 = vld [vmem:[#allocation3 + $0x8] sm:$0xff]
      %v700 = vld [vmem:[#allocation3 + $0x10] sm:$0xff]
      %704 = vrot.lane.b32.xlu0 %v698, 112
      %v705 = vpop.permute.xlu0 %704
      %706 = vrot.lane.b32.xlu0 %v699, 112
      %v707 = vpop.permute.xlu0 %706
      %708 = vrot.lane.b32.xlu0 %v700, 112
      %v709 = vpop.permute.xlu0 %708
      %v710 = vsel %vm331, %v705, %v707
      %v711 = vsel %vm331, %v707, %v709
      %714 = vst [vmem:[#allocation5 + $0x10] sm:$0xff] %v710
      %715 = vst [vmem:[#allocation5 + $0x18] sm:$0xff] %v711
      %v716 = vld [vmem:[#allocation3] sm:$0xff]
      %v717 = vld [vmem:[#allocation3 + $0x8] sm:$0xff]
      %v718 = vld [vmem:[#allocation3 + $0x10] sm:$0xff]
      %v719 = vld [vmem:[%s340] ss:$2 sm:$0x3]
      %v721 = vperm.slane %v719, 0
      %v722 = vperm.slane %v719, 1
      %723 = vrot.lane.b32.xlu0 %v721, 17
      %v724 = vpop.permute.xlu0 %723
      %725 = vrot.lane.b32.xlu0 %v722, 17
      %v726 = vpop.permute.xlu0 %725
      %v727 = vsel %vm350, %v724, %v726
      %v731 = vmul.f32 %v716, %v724
      %v732 = vmul.f32 %v717, %v727
      %v733 = vmul.f32 %v718, %v726
      %737 = vrot.lane.b32.xlu0 %v731, 111
      %v738 = vpop.permute.xlu0 %737
      %739 = vrot.lane.b32.xlu0 %v732, 111
      %v740 = vpop.permute.xlu0 %739
      %741 = vrot.lane.b32.xlu0 %v733, 111
      %v742 = vpop.permute.xlu0 %741
      %v743 = vsel %vm370, %v738, %v740
      %v744 = vsel %vm370, %v740, %v742
      %747 = vst [vmem:[#allocation5 + $0x20] sm:$0xff] %v743
      %748 = vst [vmem:[#allocation5 + $0x28] sm:$0xff] %v744
      %v749 = vld [vmem:[#allocation3] sm:$0xff]
      %v750 = vld [vmem:[#allocation3 + $0x8] sm:$0xff]
      %v751 = vld [vmem:[#allocation3 + $0x10] sm:$0xff]
      %v752 = vld [vmem:[%s5] ss:$2 sm:$0x3]
      %v754 = vperm.slane %v752, 0
      %v755 = vperm.slane %v752, 1
      %756 = vrot.lane.b32.xlu0 %v754, 31
      %v757 = vpop.permute.xlu0 %756
      %758 = vrot.lane.b32.xlu0 %v755, 31
      %v759 = vpop.permute.xlu0 %758
      %v760 = vsel %vm388, %v757, %v759
      %v764 = vmul.f32 %v749, %v757
      %v765 = vmul.f32 %v750, %v760
      %v766 = vmul.f32 %v751, %v759
      %770 = vrot.lane.b32.xlu0 %v764, 97
      %v771 = vpop.permute.xlu0 %770
      %772 = vrot.lane.b32.xlu0 %v765, 97
      %v773 = vpop.permute.xlu0 %772
      %774 = vrot.lane.b32.xlu0 %v766, 97
      %v775 = vpop.permute.xlu0 %774
      %v776 = vsel %vm409, %v771, %v773
      %v777 = vsel %vm409, %v773, %v775
      %780 = vst [vmem:[#allocation5 + $0x30] sm:$0xff] %v776
      %781 = vst [vmem:[#allocation5 + $0x38] sm:$0xff] %v777
      %v782 = vld [vmem:[#allocation3] sm:$0xff]
      %v783 = vld [vmem:[#allocation3 + $0x8] sm:$0xff]
      %v784 = vld [vmem:[#allocation3 + $0x10] sm:$0xff]
      %788 = vrot.lane.b32.xlu0 %v782, 96
      %v789 = vpop.permute.xlu0 %788
      %790 = vrot.lane.b32.xlu0 %v783, 96
      %v791 = vpop.permute.xlu0 %790
      %792 = vrot.lane.b32.xlu0 %v784, 96
      %v793 = vpop.permute.xlu0 %792
      %v794 = vsel %vm432, %v789, %v791
      %v795 = vsel %vm432, %v791, %v793
      %798 = vst [vmem:[#allocation5 + $0x40] sm:$0xff] %v794
      %799 = vst [vmem:[#allocation5 + $0x48] sm:$0xff] %v795
      %v800 = vld [vmem:[#allocation3] sm:$0xff]
      %v801 = vld [vmem:[#allocation3 + $0x8] sm:$0xff]
      %v802 = vld [vmem:[#allocation3 + $0x10] sm:$0xff]
      %v803 = vld [vmem:[%s340] ss:$2 sm:$0x3]
      %v805 = vperm.slane %v803, 0
      %v806 = vperm.slane %v803, 1
      %807 = vrot.lane.b32.xlu0 %v805, 33
      %v808 = vpop.permute.xlu0 %807
      %809 = vrot.lane.b32.xlu0 %v806, 33
      %v810 = vpop.permute.xlu0 %809
      %v811 = vsel %vm450, %v808, %v810
      %v815 = vmul.f32 %v800, %v808
      %v816 = vmul.f32 %v801, %v811
      %v817 = vmul.f32 %v802, %v810
      %821 = vrot.lane.b32.xlu0 %v815, 95
      %v822 = vpop.permute.xlu0 %821
      %823 = vrot.lane.b32.xlu0 %v816, 95
      %v824 = vpop.permute.xlu0 %823
      %825 = vrot.lane.b32.xlu0 %v817, 95
      %v826 = vpop.permute.xlu0 %825
      %v827 = vsel %vm471, %v822, %v824
      %v828 = vsel %vm471, %v824, %v826
      %831 = vst [vmem:[#allocation5 + $0x50] sm:$0xff] %v827
      %832 = vst [vmem:[#allocation5 + $0x58] sm:$0xff] %v828
      %v833 = vld [vmem:[#allocation3] sm:$0xff]
      %v834 = vld [vmem:[#allocation3 + $0x8] sm:$0xff]
      %v835 = vld [vmem:[#allocation3 + $0x10] sm:$0xff]
      %v836 = vld [vmem:[%s5] ss:$2 sm:$0x3]
      %v838 = vperm.slane %v836, 0
      %v839 = vperm.slane %v836, 1
      %840 = vrot.lane.b32.xlu0 %v838, 47
      %v841 = vpop.permute.xlu0 %840
      %842 = vrot.lane.b32.xlu0 %v839, 47
      %v843 = vpop.permute.xlu0 %842
      %v844 = vsel %vm489, %v841, %v843
      %v848 = vmul.f32 %v833, %v841
      %v849 = vmul.f32 %v834, %v844
      %v850 = vmul.f32 %v835, %v843
      %854 = vrot.lane.b32.xlu0 %v848, 81
      %v855 = vpop.permute.xlu0 %854
      %856 = vrot.lane.b32.xlu0 %v849, 81
      %v857 = vpop.permute.xlu0 %856
      %858 = vrot.lane.b32.xlu0 %v850, 81
      %v859 = vpop.permute.xlu0 %858
      %v860 = vsel %vm509, %v855, %v857
      %v861 = vsel %vm509, %v857, %v859
      %864 = vst [vmem:[#allocation5 + $0x60] sm:$0xff] %v860
      %865 = vst [vmem:[#allocation5 + $0x68] sm:$0xff] %v861
      %v866 = vld [vmem:[#allocation3] sm:$0xff]
      %v867 = vld [vmem:[#allocation3 + $0x8] sm:$0xff]
      %v868 = vld [vmem:[#allocation3 + $0x10] sm:$0xff]
      %872 = vrot.lane.b32.xlu0 %v866, 80
      %v873 = vpop.permute.xlu0 %872
      %874 = vrot.lane.b32.xlu0 %v867, 80
      %v875 = vpop.permute.xlu0 %874
      %876 = vrot.lane.b32.xlu0 %v868, 80
      %v877 = vpop.permute.xlu0 %876
      %v878 = vsel %vm533, %v873, %v875
      %v879 = vsel %vm533, %v875, %v877
      %882 = vst [vmem:[#allocation5 + $0x70] sm:$0xff] %v878
      %883 = vst [vmem:[#allocation5 + $0x78] sm:$0xff] %v879
      %v884 = vld [vmem:[#allocation3] sm:$0xff]
      %v885 = vld [vmem:[#allocation3 + $0x8] sm:$0xff]
      %v886 = vld [vmem:[#allocation3 + $0x10] sm:$0xff]
      %v887 = vld [vmem:[%s340] ss:$2 sm:$0x3]
      %v889 = vperm.slane %v887, 0
      %v890 = vperm.slane %v887, 1
      %891 = vrot.lane.b32.xlu0 %v889, 49
      %v892 = vpop.permute.xlu0 %891
      %893 = vrot.lane.b32.xlu0 %v890, 49
      %v894 = vpop.permute.xlu0 %893
      %v895 = vsel %vm551, %v892, %v894
      %v899 = vmul.f32 %v884, %v892
      %v900 = vmul.f32 %v885, %v895
      %v901 = vmul.f32 %v886, %v894
      %905 = vrot.lane.b32.xlu0 %v899, 79
      %v906 = vpop.permute.xlu0 %905
      %907 = vrot.lane.b32.xlu0 %v900, 79
      %v908 = vpop.permute.xlu0 %907
      %909 = vrot.lane.b32.xlu0 %v901, 79
      %v910 = vpop.permute.xlu0 %909
      %v911 = vsel %vm571, %v906, %v908
      %v912 = vsel %vm571, %v908, %v910
      %915 = vst [vmem:[#allocation5 + $0x80] sm:$0xff] %v911
      %916 = vst [vmem:[#allocation5 + $0x88] sm:$0xff] %v912
      %v917 = vld [vmem:[%s3] sm:$0xf]
      %v918 = vld [vmem:[#allocation5] sm:$0xff]
      %v919 = vld [vmem:[#allocation5 + $0x8] sm:$0xff]
      %v920 = vld [vmem:[#allocation5 + $0x10] sm:$0xff]
      %v921 = vld [vmem:[#allocation5 + $0x18] sm:$0xff]
      %v922 = vld [vmem:[#allocation5 + $0x20] sm:$0xff]
      %v923 = vld [vmem:[#allocation5 + $0x28] sm:$0xff]
      %v924 = vld [vmem:[#allocation5 + $0x30] sm:$0xff]
      %v925 = vld [vmem:[#allocation5 + $0x38] sm:$0xff]
      %v926 = vld [vmem:[#allocation5 + $0x40] sm:$0xff]
      %v927 = vld [vmem:[#allocation5 + $0x48] sm:$0xff]
      %v928 = vld [vmem:[#allocation5 + $0x50] sm:$0xff]
      %v929 = vld [vmem:[#allocation5 + $0x58] sm:$0xff]
      %v930 = vld [vmem:[#allocation5 + $0x60] sm:$0xff]
      %v931 = vld [vmem:[#allocation5 + $0x68] sm:$0xff]
      %v932 = vld [vmem:[#allocation5 + $0x70] sm:$0xff]
      %v933 = vld [vmem:[#allocation5 + $0x78] sm:$0xff]
      %v934 = vld [vmem:[#allocation5 + $0x80] sm:$0xff]
      %v935 = vld [vmem:[#allocation5 + $0x88] sm:$0xff]
      %v936 = vpack.c.bf16 %v920, %v918
      %v937 = vpack.c.bf16 %v921, %v919
      %v938 = vpack.c.bf16 %v924, %v922
      %v939 = vpack.c.bf16 %v925, %v923
      %v940 = vpack.c.bf16 %v928, %v926
      %v941 = vpack.c.bf16 %v929, %v927
      %v942 = vpack.c.bf16 %v932, %v930
      %v943 = vpack.c.bf16 %v933, %v931
      %v944 = vpack.c.bf16 %v934, %v934
      %v945 = vpack.c.bf16 %v935, %v935
      %vm946 = vcmask 588800
      %v948 = vsel %vm946, %v917, 0
      %v951 = vsel %vm282, %v944, 0
      %v954 = vsel %vm282, %v945, 0
      %956 = vmatpush.bf16.msra.mxu0 0
      %957 = vmatpush.bf16.msra.mxu0 0
      %958 = vmatpush.bf16.msra.mxu0 0
      %959 = vmatpush.bf16.msra.mxu0 %v951
      %960 = vmatpush.bf16.msra.mxu0 %v942
      %961 = vmatpush.bf16.msra.mxu0 %v940
      %962 = vmatpush.bf16.msra.mxu0 %v938
      %963 = vmatpush.bf16.msra.mxu0 %v936
      %964 = vmatmul.bf16.gmra.mxu0 %v948
      %v965 = vpop.f32.mrf.mxu0
      %v966 = vadd.f32 0.0, %v965
      %v967 = vpop.f32.mrf.mxu0
      %968 = vdwg.mxu0
      %969 = vmatpush.bf16.msra.mxu0 0
      %970 = vmatpush.bf16.msra.mxu0 0
      %971 = vmatpush.bf16.msra.mxu0 0
      %972 = vmatpush.bf16.msra.mxu0 %v954
      %973 = vmatpush.bf16.msra.mxu0 %v943
      %974 = vmatpush.bf16.msra.mxu0 %v941
      %975 = vmatpush.bf16.msra.mxu0 %v939
      %976 = vmatpush.bf16.msra.mxu0 %v937
      %977 = vmatmul.bf16.gmra.mxu0 %v948
      %v978 = vpop.f32.mrf.mxu0
      %v979 = vadd.f32 0.0, %v978
      %v980 = vpop.f32.mrf.mxu0
      %981 = vdwg.mxu0
      %v982 = vld [vmem:[%s4] sm:$0xff]
      %984 = vset.pattern.permute.xlu0 0
      %985 = vperm.xlu0 %984, %v982
      %v986 = vpop.permute.xlu0 %985
      %v988 = vmul.f32 %v966, %v986
      %v989 = vmul.f32 %v979, %v986
      %s990 = scalar_lea.vmem %s4, 8
      %v991 = vld [vmem:[%s990] sm:$0xff]
      %993 = vset.pattern.permute.xlu0 0
      %994 = vperm.xlu0 %993, %v991
      %v995 = vpop.permute.xlu0 %994
      %v997 = vadd.f32 %v988, %v995
      %v998 = vadd.f32 %v989, %v995
      %v999 = vmax.f32 %v997, 0.0
      %v1000 = vmax.f32 %v998, 0.0
      %1001 = vst [vmem:[%s251] sm:$0xff] %v999
      %1002 = vst [vmem:[%s251 + $0x8] sm:$0xff] %v1000
      %p1003 = scmp.lt.s32.totalorder %s17, 1
      %s1004 = scalar_select %p1003, %s17, 1
      %s1005 = smul.addr %s1004, 2
      %s1006 = smul.addr %s1005, 8
      %s1007 = scalar_lea.vmem %s6, %s1006
      // Predicated region
      $region45: #{conv_block_bn_forward.1} parent=43 // pred_check
        %p1008 = pneg %p166
      $region46: #{conv_block_bn_forward.1} parent=43 // pred_check_branch
        %1010 = sbr.rel (%p1008) target = $region48
      $region47: #{conv_block_bn_forward.1} parent=43 // pred_region
        _
      $region48: #{conv_block_bn_forward.1} parent=43 // pred_fallthru
        _
    $region44: #{conv_block_bn_forward.1} parent=5 // pred_fallthru
      _
    %p1011 = scmp.le.s32.totalorder 2, %s12
    // Predicated region
    $region49: #{conv_block_bn_forward.1} parent=5 // pred_check
      %p1012 = pneg %p1011
    $region50: #{conv_block_bn_forward.1} parent=5 // pred_check_branch
      %1014 = sbr.rel (%p1012) target = $region52
    $region51: #{conv_block_bn_forward.1} parent=5 // pred_region
      %s1015 = ssub.s32 %s12, 2
      // Predicated region
      $region53: #{conv_block_bn_forward.1} parent=51 // pred_check
        %p1016 = pneg %p172
      $region54: #{conv_block_bn_forward.1} parent=51 // pred_check_branch
        %1018 = sbr.rel (%p1016) target = $region56
      $region55: #{conv_block_bn_forward.1} parent=51 // pred_region
        %p1019 = scmp.lt.s32.totalorder %s18, 1
        %s1020 = scalar_select %p1019, %s18, 1
        %s1021 = smul.addr %s1020, 2
        %s1022 = smul.addr %s1021, 8
        %s1023 = scalar_lea.vmem %s6, %s1022
      $region56: #{conv_block_bn_forward.1} parent=51 // pred_fallthru
        _
    $region52: #{conv_block_bn_forward.1} parent=5 // pred_fallthru
      _
  $region6: #{conv_block_bn_forward.1} parent=0 // loop_footer
    %s16 = sadd.s32 1, %s12
  $region7: #{conv_block_bn_forward.1} parent=0 // loop_footer_branch
    %11 = sbr.rel target = $region3
  $region8: #{conv_block_bn_forward.1} parent=0 // loop_exit
    _

</llo_original>
